<compile_context>
chip_gen: v5e
topology: v5e:2x2
jax: 0.10.0
libtpu: 0.0.40
codegen_flags: <defaults>
</compile_context>

<pallas_src>
import jax
import jax.numpy as jnp
from jax.experimental import pallas as pl
from jax.experimental.pallas import tpu as pltpu


_PACK_ROWS = 32  # rows folded into one lane-dense packed row (32 * c_out = 128 lanes)


def _nbnorm_kernel(xp_ref, w_ref, b_ref, n_ref, p_ref, pi_ref):
    nw = n_ref.shape[-1]                     # R * c_out (= 128 for c_out = 4)

    # One fused, lane-dense MXU projection per block:
    #   (tile_r, R*c_in) @ (R*c_in, 3*R*c_out) + bias
    fused = jnp.dot(xp_ref[...], w_ref[...],
                    preferred_element_type=jnp.float32) + b_ref[...]

    # Head slices at lane offsets 0 / nw / 2*nw — multiples of 128, so these
    # are tile-aligned views (no cross-lane realign needed).
    n_lin = fused[:, 0 * nw:1 * nw]
    p_lin = fused[:, 1 * nw:2 * nw]
    pi_lin = fused[:, 2 * nw:3 * nw]

    # Numerically stable softplus: max(x, 0) + log1p(exp(-|x|)).
    n_ref[...] = (jnp.maximum(n_lin, 0.0)
                  + jnp.log1p(jnp.exp(-jnp.abs(n_lin)))).astype(n_ref.dtype)
    # Sigmoids: EUP transcendentals on fully lane-dense data.
    p_ref[...] = jax.nn.sigmoid(p_lin).astype(p_ref.dtype)
    pi_ref[...] = jax.nn.sigmoid(pi_lin).astype(pi_ref.dtype)


def _round_up(a, m):
    return ((a + m - 1) // m) * m


def _block_diag(w, r):
    """(c_in, c_out) -> (r*c_in, r*c_out): block-diagonal with r copies of w."""
    return jnp.kron(jnp.eye(r, dtype=w.dtype), w)


def nbnorm_zero_inflated(x, wn, bn, wp, bp, wpi, bpi, *, tile_rows=32768):
    """Forward pass of NBNorm_ZeroInflated.

    Args:
      x:  (B, N, c_in, 1)   — same input the PyTorch module takes.
      w*: (c_in, c_out)     — transpose of the Conv2d (c_out, c_in, 1, 1) weight.
      b*: (c_out,)          — conv biases.
      tile_rows: rows of x processed per grid step (rounded to the packing).

    Returns (n, p, pi), each (B, N, c_out) — same as the PyTorch module.
    """
    B, N, c_in, last = x.shape
    assert last == 1, "PyTorch forward requires a trailing dim of size 1"
    c_out = wn.shape[1]
    M = B * N
    R = _PACK_ROWS

    # ---- pack rows so every VMEM block / store is lane-dense -----------------
    x2d = x.reshape(M, c_in)
    m_pack = _round_up(M, R)
    if m_pack != M:
        # Only pad up to the 32-row packing granule (<= 31 rows).  Tile-level
        # raggedness is handled by the cdiv grid + masked final block below, so
        # there is no full-tile pad / output slice copy when M % 32 == 0.
        x2d = jnp.pad(x2d, ((0, m_pack - M), (0, 0)))
    rows_p = m_pack // R
    kk = R * c_in            # packed contraction width  (256 for c_in = 8)
    nw = R * c_out           # packed output width/head  (128 for c_out = 4)
    xp = x2d.reshape(rows_p, kk)                    # free contiguous reshape

    # Fused block-diagonal weights / bias: one matmul produces all three heads,
    # already in the packed (rows-in-lanes) output layout.
    w_big = jnp.concatenate(
        [_block_diag(wn, R), _block_diag(wp, R), _block_diag(wpi, R)], axis=1)
    b_big = jnp.concatenate(
        [jnp.tile(bn, R), jnp.tile(bp, R), jnp.tile(bpi, R)]).reshape(1, 3 * nw)

    # ---- row tiling -----------------------------------------------------------
    tile_r = max(8, (min(tile_rows // R, rows_p) // 8) * 8)
    if tile_r >= rows_p:
        tile_r = rows_p                  # single block == full (small) array
    grid_r = pl.cdiv(rows_p, tile_r)     # ragged final block is masked by Pallas

    x_spec = pl.BlockSpec((tile_r, kk), lambda i: (i, 0))
    w_spec = pl.BlockSpec((kk, 3 * nw), lambda i: (0, 0))
    b_spec = pl.BlockSpec((1, 3 * nw), lambda i: (0, 0))
    o_spec = pl.BlockSpec((tile_r, nw), lambda i: (i, 0))
    o_shape = jax.ShapeDtypeStruct((rows_p, nw), x.dtype)

    itemsize = jnp.dtype(x.dtype).itemsize
    cost = pl.CostEstimate(
        flops=2 * rows_p * kk * 3 * nw,              # MXU flops actually issued
        transcendentals=4 * m_pack * c_out,
        bytes_accessed=rows_p * (kk + 3 * nw) * itemsize + (kk + 1) * 3 * nw * 4,
    )

    # Per-step VMEM (double-buffered in/out blocks + resident fused weights) is
    # ~8 MiB at the default tile; 32 MiB leaves headroom on every generation
    # (v7x physical VMEM = 64 MiB) while overriding v5e's 16 MiB scoped default.
    params = pltpu.CompilerParams(
        dimension_semantics=("parallel",),
        vmem_limit_bytes=32 * 1024 * 1024,
    )

    n_pk, p_pk, pi_pk = pl.pallas_call(
        _nbnorm_kernel,
        out_shape=(o_shape, o_shape, o_shape),
        grid_spec=pltpu.PrefetchScalarGridSpec(
            num_scalar_prefetch=0,
            grid=(grid_r,),
            in_specs=[x_spec, w_spec, b_spec],
            out_specs=[o_spec, o_spec, o_spec],
        ),
        compiler_params=params,
        cost_estimate=cost,
    )(xp, w_big, b_big)

    def unpack(o):
        o = o.reshape(m_pack, c_out)                 # free contiguous reshape
        if m_pack != M:
            o = o[:M]
        return o.reshape(B, N, c_out)

    return unpack(n_pk), unpack(p_pk), unpack(pi_pk)


def _reference(x, wn, bn, wp, bp, wpi, bpi):
    """Pure-JAX reference of the PyTorch forward."""
    B, N, c_in, _ = x.shape
    c_out = wn.shape[1]
    xf = x.reshape(B * N, c_in).astype(jnp.float32)
    n = jax.nn.softplus(xf @ wn + bn)
    p = jax.nn.sigmoid(xf @ wp + bp)
    pi = jax.nn.sigmoid(xf @ wpi + bpi)
    return (n.reshape(B, N, c_out), p.reshape(B, N, c_out),
            pi.reshape(B, N, c_out))


def _check(outs, refs, tag):
    for o, r, name in zip(outs, refs, ("n", "p", "pi")):
        assert o.shape == r.shape, (tag, name, o.shape, r.shape)
        assert jnp.allclose(o, r, atol=1e-5, rtol=1e-5), (tag, name)


if __name__ == "__main__":
    key = jax.random.PRNGKey(0)
    c_in, c_out = 8, 4
    ks = jax.random.split(key, 10)

    # Conv2d(c_in, c_out, 1) == linear c_in -> c_out; weights stored transposed
    # as (c_in, c_out) for x @ W (PyTorch checkpoint layout is (c_out, c_in, 1, 1)).
    bound = 1.0 / (c_in ** 0.5)
    wn = jax.random.uniform(ks[1], (c_in, c_out), minval=-bound, maxval=bound)
    bn = jax.random.uniform(ks[2], (c_out,), minval=-bound, maxval=bound)
    wp = jax.random.uniform(ks[3], (c_in, c_out), minval=-bound, maxval=bound)
    bp = jax.random.uniform(ks[4], (c_out,), minval=-bound, maxval=bound)
    wpi = jax.random.uniform(ks[5], (c_in, c_out), minval=-bound, maxval=bound)
    bpi = jax.random.uniform(ks[6], (c_out,), minval=-bound, maxval=bound)

    # Case 1: tiny problem, M = 32 == one packing group, single grid step.
    B1, N1 = 2, 16
    x1 = jax.random.normal(ks[0], (B1, N1, c_in, 1), dtype=jnp.float32)
    out1 = nbnorm_zero_inflated(x1, wn, bn, wp, bp, wpi, bpi)
    jax.block_until_ready(out1)
    _check(out1, _reference(x1, wn, bn, wp, bp, wpi, bpi), "case1")

    # Case 2: M = 300 (not a multiple of 32 -> granule pad) with a small tile
    # (8 packed rows / step) -> 2 grid steps and a masked ragged final block.
    B2, N2 = 3, 100
    x2 = jax.random.normal(ks[7], (B2, N2, c_in, 1), dtype=jnp.float32)
    out2 = nbnorm_zero_inflated(x2, wn, bn, wp, bp, wpi, bpi, tile_rows=256)
    jax.block_until_ready(out2)
    _check(out2, _reference(x2, wn, bn, wp, bp, wpi, bpi), "case2")

    # Case 3: M = 1024, evenly tiled multi-step grid (no pad, no ragged block).
    B3, N3 = 4, 256
    x3 = jax.random.normal(ks[8], (B3, N3, c_in, 1), dtype=jnp.float32)
    out3 = nbnorm_zero_inflated(x3, wn, bn, wp, bp, wpi, bpi, tile_rows=512)
    jax.block_until_ready(out3)
    _check(out3, _reference(x3, wn, bn, wp, bp, wpi, bpi), "case3")

    print("KERNEL_OK")
</pallas_src>

<mosaic_0001>
module attributes {stable_mosaic.version = 11 : i64} {
  func.func @_nbnorm_kernel(%arg0: i32, %arg1: memref<1x256xf32, #tpu.memory_space<vmem>>, %arg2: memref<256x384xf32, #tpu.memory_space<vmem>>, %arg3: memref<1x384xf32, #tpu.memory_space<vmem>>, %arg4: memref<1x128xf32, #tpu.memory_space<vmem>>, %arg5: memref<1x128xf32, #tpu.memory_space<vmem>>, %arg6: memref<1x128xf32, #tpu.memory_space<vmem>>) attributes {dimension_semantics = [#tpu.dimension_semantics<parallel>], iteration_bounds = array<i64: 1>, scalar_prefetch = 0 : i64, scratch_operands = 0 : i64, tpu.core_type = #tpu.core_type<tc>, window_params = [{transform_indices = @transform_0, window_bounds = array<i64: 1, 256>}, {pipeline_mode = #tpu.pipeline_mode<synchronous>, transform_indices = @transform_1, window_bounds = array<i64: 256, 384>}, {pipeline_mode = #tpu.pipeline_mode<synchronous>, transform_indices = @transform_2, window_bounds = array<i64: 1, 384>}, {transform_indices = @transform_3, window_bounds = array<i64: 1, 128>}, {transform_indices = @transform_4, window_bounds = array<i64: 1, 128>}, {transform_indices = @transform_5, window_bounds = array<i64: 1, 128>}]} {
    %c0 = arith.constant 0 : index
    %c0_0 = arith.constant 0 : index
    %0 = vector.load %arg1[%c0, %c0_0] : memref<1x256xf32, #tpu.memory_space<vmem>>, vector<1x256xf32>
    %c0_1 = arith.constant 0 : index
    %c0_2 = arith.constant 0 : index
    %1 = vector.load %arg2[%c0_1, %c0_2] : memref<256x384xf32, #tpu.memory_space<vmem>>, vector<256x384xf32>
    %cst = arith.constant dense<0.000000e+00> : vector<1x384xf32>
    %2 = tpu.matmul %0, %1, %cst {dimension_numbers = #tpu.dot_dimension_numbers<[1], [0], [0], [1], [0, 0, 1, 1], [], []>} : vector<1x256xf32>, vector<256x384xf32>, vector<1x384xf32> -> vector<1x384xf32>
    %c0_3 = arith.constant 0 : index
    %c0_4 = arith.constant 0 : index
    %3 = vector.load %arg3[%c0_3, %c0_4] : memref<1x384xf32, #tpu.memory_space<vmem>>, vector<1x384xf32>
    %4 = arith.addf %2, %3 : vector<1x384xf32>
    %5 = vector.extract_strided_slice %4 {offsets = [0, 0], sizes = [1, 128], strides = [1, 1]} : vector<1x384xf32> to vector<1x128xf32>
    %6 = vector.extract_strided_slice %4 {offsets = [0, 128], sizes = [1, 128], strides = [1, 1]} : vector<1x384xf32> to vector<1x128xf32>
    %7 = vector.extract_strided_slice %4 {offsets = [0, 256], sizes = [1, 128], strides = [1, 1]} : vector<1x384xf32> to vector<1x128xf32>
    %cst_5 = arith.constant 0.000000e+00 : f32
    %8 = vector.broadcast %cst_5 : f32 to vector<1x128xf32>
    %9 = arith.maximumf %5, %8 : vector<1x128xf32>
    %10 = math.absf %5 : vector<1x128xf32>
    %cst_6 = arith.constant 0.000000e+00 : f32
    %11 = vector.broadcast %cst_6 : f32 to vector<1x128xf32>
    %12 = arith.subf %11, %10 : vector<1x128xf32>
    %13 = math.exp %12 : vector<1x128xf32>
    %14 = math.log1p %13 : vector<1x128xf32>
    %15 = arith.addf %9, %14 : vector<1x128xf32>
    %c0_7 = arith.constant 0 : index
    %c0_8 = arith.constant 0 : index
    %16 = vector.load %arg4[%c0_7, %c0_8] : memref<1x128xf32, #tpu.memory_space<vmem>>, vector<1x128xf32>
    tpu.vector_store %arg4[%c0_7, %c0_8], %15 {strides = array<i32>} : memref<1x128xf32, #tpu.memory_space<vmem>>, vector<1x128xf32>,
    %17 = arith.negf %6 : vector<1x128xf32>
    %18 = math.exp %17 : vector<1x128xf32>
    %cst_9 = arith.constant 1.000000e+00 : f32
    %19 = vector.broadcast %cst_9 : f32 to vector<1x128xf32>
    %20 = arith.addf %19, %18 : vector<1x128xf32>
    %21 = arith.divf %19, %20 : vector<1x128xf32>
    %c0_10 = arith.constant 0 : index
    %c0_11 = arith.constant 0 : index
    %22 = vector.load %arg5[%c0_10, %c0_11] : memref<1x128xf32, #tpu.memory_space<vmem>>, vector<1x128xf32>
    tpu.vector_store %arg5[%c0_10, %c0_11], %21 {strides = array<i32>} : memref<1x128xf32, #tpu.memory_space<vmem>>, vector<1x128xf32>,
    %23 = arith.negf %7 : vector<1x128xf32>
    %24 = math.exp %23 : vector<1x128xf32>
    %cst_12 = arith.constant 1.000000e+00 : f32
    %25 = vector.broadcast %cst_12 : f32 to vector<1x128xf32>
    %26 = arith.addf %25, %24 : vector<1x128xf32>
    %27 = arith.divf %25, %26 : vector<1x128xf32>
    %c0_13 = arith.constant 0 : index
    %c0_14 = arith.constant 0 : index
    %28 = vector.load %arg6[%c0_13, %c0_14] : memref<1x128xf32, #tpu.memory_space<vmem>>, vector<1x128xf32>
    tpu.vector_store %arg6[%c0_13, %c0_14], %27 {strides = array<i32>} : memref<1x128xf32, #tpu.memory_space<vmem>>, vector<1x128xf32>,
    return
  }
  func.func @transform_0(%arg0: i32) -> (i32, i32) {
    %c0_i32 = arith.constant 0 : i32
    %c0_i32_0 = arith.constant 0 : i32
    return %arg0, %c0_i32 : i32, i32
  }
  func.func @transform_1(%arg0: i32) -> (i32, i32) {
    %c0_i32 = arith.constant 0 : i32
    %c0_i32_0 = arith.constant 0 : i32
    %c0_i32_1 = arith.constant 0 : i32
    return %c0_i32, %c0_i32_0 : i32, i32
  }
  func.func @transform_2(%arg0: i32) -> (i32, i32) {
    %c0_i32 = arith.constant 0 : i32
    %c0_i32_0 = arith.constant 0 : i32
    %c0_i32_1 = arith.constant 0 : i32
    return %c0_i32, %c0_i32_0 : i32, i32
  }
  func.func @transform_3(%arg0: i32) -> (i32, i32) {
    %c0_i32 = arith.constant 0 : i32
    %c0_i32_0 = arith.constant 0 : i32
    return %arg0, %c0_i32 : i32, i32
  }
  func.func @transform_4(%arg0: i32) -> (i32, i32) {
    %c0_i32 = arith.constant 0 : i32
    %c0_i32_0 = arith.constant 0 : i32
    return %arg0, %c0_i32 : i32, i32
  }
  func.func @transform_5(%arg0: i32) -> (i32, i32) {
    %c0_i32 = arith.constant 0 : i32
    %c0_i32_0 = arith.constant 0 : i32
    return %arg0, %c0_i32 : i32, i32
  }
}

</mosaic_0001>

<llo_original>
// kernel: tpu_custom_call.1
$region0: #{tpu_custom_call.1}
  #allocation0 [shape = 'u32[]', space=smem, size = 0x4, offset = 0x4, fixed_abs, tag = 'smem constant byte address 0x4 - core index']
  #allocation1 [shape = 'u32[72,128]{1,0:T(1,128)}', space=vmem, size = 0x9000, scoped, tag = 'internal scratch']
  %s0 = inlined_call_operand.hbm [shape: f32[1,256], index: 0, kind: input, shape index: {}]
  %s1 = inlined_call_operand.hbm [shape: f32[256,384], index: 1, kind: input, shape index: {}]
  %s2 = inlined_call_operand.hbm [shape: f32[1,384], index: 2, kind: input, shape index: {}]
  %s3 = inlined_call_operand.hbm [shape: f32[1,128], index: 3, kind: output, shape index: {0}]
  %s4 = inlined_call_operand.hbm [shape: f32[1,128], index: 4, kind: output, shape index: {1}]
  %s5 = inlined_call_operand.hbm [shape: f32[1,128], index: 5, kind: output, shape index: {2}]
  %6 = xla_tuple %s3, %s4, %s5
  %s7 = sld [smem:[#allocation0]]
  $region50: #{tpu_custom_call.1} parent=0
    _
  %s9 = ssub.s32 1, %s7
  %s10 = scalar_select 0, %s9, %s7
  $region1: #{tpu_custom_call.1} parent=0
    #allocation2 [shape = 'u8[1024]{0}', space=vmem, size = 0x400, scoped, tag = 'input window, operand 0, single buffered']
    #allocation3 [shape = 's32[1]{0}', space=sflag, size = 0x4, scoped, tag = 'scoped memory for tpu_custom_call.1']
    #allocation4 [shape = 's32[1]{0}', space=sflag, size = 0x4, scoped, tag = 'scoped memory for tpu_custom_call.1']
    #allocation5 [shape = 'u8[393216]{0}', space=vmem, size = 0x60000, scoped, tag = 'input window, operand 1, single buffered']
    #allocation6 [shape = 's32[1]{0}', space=sflag, size = 0x4, scoped, tag = 'scoped memory for tpu_custom_call.1']
    #allocation7 [shape = 'u8[1536]{0}', space=vmem, size = 0x800, scoped, tag = 'input window, operand 2, single buffered']
    #allocation8 [shape = 'u8[512]{0}', space=vmem, size = 0x400, scoped, tag = 'output window, operand 0, single buffered']
    #allocation9 [shape = 'u8[512]{0}', space=vmem, size = 0x400, scoped, tag = 'output window, operand 1, single buffered']
    #allocation10 [shape = 's32[1]{0}', space=sflag, size = 0x4, scoped, tag = 'scoped memory for tpu_custom_call.1']
    #allocation11 [shape = 'u8[512]{0}', space=vmem, size = 0x400, scoped, tag = 'output window, operand 2, single buffered']
    %11 = vsyncpa [#allocation3], 0
    %12 = vsyncpa [#allocation6], 0
    %13 = vsyncpa [#allocation4], 0
    %14 = vsyncpa [#allocation10], 0
    // Predicated region
    $region2: #{tpu_custom_call.1} parent=1 // pred_check
      _
    $region3: #{tpu_custom_call.1} parent=1 // pred_check_branch
      %16 = sbr.rel (0) target = $region5
    $region4: #{tpu_custom_call.1} parent=1 // pred_region
      %18 = vsyncadd [#allocation3], 0
      %s20 = sshll.u32 %s0, 4
      %s21 = int_to_ptr.hbm [resolvable:$true] %s20
      %s22 = sshll.u32 [#allocation2], 4
      %s23 = int_to_ptr.vmem [resolvable:$true] %s22
      %25 = dma.hbm_to_vmem [thread:$0]  %s21, 32, %s23, [#allocation3]
    $region5: #{tpu_custom_call.1} parent=1 // pred_fallthru
      _
    // Predicated region
    $region6: #{tpu_custom_call.1} parent=1 // pred_check
      _
    $region7: #{tpu_custom_call.1} parent=1 // pred_check_branch
      %27 = sbr.rel (0) target = $region9
    $region8: #{tpu_custom_call.1} parent=1 // pred_region
      %29 = vsyncadd [#allocation6], 0
      %s30 = sshll.u32 %s1, 4
      %s31 = int_to_ptr.hbm [resolvable:$true] %s30
      %s32 = sshll.u32 [#allocation5], 4
      %s33 = int_to_ptr.vmem [resolvable:$true] %s32
      %38 = dma.hbm_to_vmem [thread:$0]  %s31, 12288, %s33, [#allocation6], 384, 384, 24
    $region9: #{tpu_custom_call.1} parent=1 // pred_fallthru
      _
    // Predicated region
    $region10: #{tpu_custom_call.1} parent=1 // pred_check
      _
    $region11: #{tpu_custom_call.1} parent=1 // pred_check_branch
      %40 = sbr.rel (0) target = $region13
    $region12: #{tpu_custom_call.1} parent=1 // pred_region
      %42 = vsyncadd [#allocation6], 0
      %s44 = sshll.u32 %s2, 4
      %s45 = int_to_ptr.hbm [resolvable:$true] %s44
      %s46 = sshll.u32 [#allocation7], 4
      %s47 = int_to_ptr.vmem [resolvable:$true] %s46
      %49 = dma.hbm_to_vmem [thread:$0]  %s45, 48, %s47, [#allocation6]
    $region13: #{tpu_custom_call.1} parent=1 // pred_fallthru
      _
    // Predicated region
    $region14: #{tpu_custom_call.1} parent=1 // pred_check
      _
    $region15: #{tpu_custom_call.1} parent=1 // pred_check_branch
      %51 = sbr.rel (0) target = $region17
    $region16: #{tpu_custom_call.1} parent=1 // pred_region
      %53 = dma.done [#allocation3], 32
    $region17: #{tpu_custom_call.1} parent=1 // pred_fallthru
      _
    // Predicated region
    $region18: #{tpu_custom_call.1} parent=1 // pred_check
      _
    $region19: #{tpu_custom_call.1} parent=1 // pred_check_branch
      %55 = sbr.rel (0) target = $region21
    $region20: #{tpu_custom_call.1} parent=1 // pred_region
      %57 = dma.done [#allocation6], 12288
    $region21: #{tpu_custom_call.1} parent=1 // pred_fallthru
      _
    // Predicated region
    $region22: #{tpu_custom_call.1} parent=1 // pred_check
      _
    $region23: #{tpu_custom_call.1} parent=1 // pred_check_branch
      %59 = sbr.rel (0) target = $region25
    $region24: #{tpu_custom_call.1} parent=1 // pred_region
      %61 = dma.done [#allocation6], 48
    $region25: #{tpu_custom_call.1} parent=1 // pred_fallthru
      _
    %v62 = vld [vmem:[#allocation2] sm:$0x3]
    %v63 = vld [vmem:[#allocation5] sm:$0xff]
    %v64 = vld [vmem:[#allocation5 + $0x8] sm:$0xff]
    %v65 = vld [vmem:[#allocation5 + $0x10] sm:$0xff]
    %v66 = vld [vmem:[#allocation5 + $0x18] sm:$0xff]
    %v67 = vld [vmem:[#allocation5 + $0x20] sm:$0xff]
    %v68 = vld [vmem:[#allocation5 + $0x28] sm:$0xff]
    %v69 = vld [vmem:[#allocation5 + $0x30] sm:$0xff]
    %v70 = vld [vmem:[#allocation5 + $0x38] sm:$0xff]
    %v71 = vld [vmem:[#allocation5 + $0x40] sm:$0xff]
    %v72 = vld [vmem:[#allocation5 + $0x48] sm:$0xff]
    %v73 = vld [vmem:[#allocation5 + $0x50] sm:$0xff]
    %v74 = vld [vmem:[#allocation5 + $0x58] sm:$0xff]
    %v75 = vld [vmem:[#allocation5 + $0x60] sm:$0xff]
    %v76 = vld [vmem:[#allocation5 + $0x68] sm:$0xff]
    %v77 = vld [vmem:[#allocation5 + $0x70] sm:$0xff]
    %v78 = vld [vmem:[#allocation5 + $0x78] sm:$0xff]
    %v79 = vld [vmem:[#allocation5 + $0x80] sm:$0xff]
    %v80 = vld [vmem:[#allocation5 + $0x88] sm:$0xff]
    %v81 = vld [vmem:[#allocation5 + $0x90] sm:$0xff]
    %v82 = vld [vmem:[#allocation5 + $0x98] sm:$0xff]
    %v83 = vld [vmem:[#allocation5 + $0xa0] sm:$0xff]
    %v84 = vld [vmem:[#allocation5 + $0xa8] sm:$0xff]
    %v85 = vld [vmem:[#allocation5 + $0xb0] sm:$0xff]
    %v86 = vld [vmem:[#allocation5 + $0xb8] sm:$0xff]
    %v87 = vld [vmem:[#allocation5 + $0xc0] sm:$0xff]
    %v88 = vld [vmem:[#allocation5 + $0xc8] sm:$0xff]
    %v89 = vld [vmem:[#allocation5 + $0xd0] sm:$0xff]
    %v90 = vld [vmem:[#allocation5 + $0xd8] sm:$0xff]
    %v91 = vld [vmem:[#allocation5 + $0xe0] sm:$0xff]
    %v92 = vld [vmem:[#allocation5 + $0xe8] sm:$0xff]
    %v93 = vld [vmem:[#allocation5 + $0xf0] sm:$0xff]
    %v94 = vld [vmem:[#allocation5 + $0xf8] sm:$0xff]
    %v95 = vld [vmem:[#allocation5 + $0x100] sm:$0xff]
    %v96 = vld [vmem:[#allocation5 + $0x108] sm:$0xff]
    %v97 = vld [vmem:[#allocation5 + $0x110] sm:$0xff]
    %v98 = vld [vmem:[#allocation5 + $0x118] sm:$0xff]
    %v99 = vld [vmem:[#allocation5 + $0x120] sm:$0xff]
    %v100 = vld [vmem:[#allocation5 + $0x128] sm:$0xff]
    %v101 = vld [vmem:[#allocation5 + $0x130] sm:$0xff]
    %v102 = vld [vmem:[#allocation5 + $0x138] sm:$0xff]
    %v103 = vld [vmem:[#allocation5 + $0x140] sm:$0xff]
    %v104 = vld [vmem:[#allocation5 + $0x148] sm:$0xff]
    %v105 = vld [vmem:[#allocation5 + $0x150] sm:$0xff]
    %v106 = vld [vmem:[#allocation5 + $0x158] sm:$0xff]
    %v107 = vld [vmem:[#allocation5 + $0x160] sm:$0xff]
    %v108 = vld [vmem:[#allocation5 + $0x168] sm:$0xff]
    %v109 = vld [vmem:[#allocation5 + $0x170] sm:$0xff]
    %v110 = vld [vmem:[#allocation5 + $0x178] sm:$0xff]
    %v111 = vld [vmem:[#allocation5 + $0x180] sm:$0xff]
    %v112 = vld [vmem:[#allocation5 + $0x188] sm:$0xff]
    %v113 = vld [vmem:[#allocation5 + $0x190] sm:$0xff]
    %v114 = vld [vmem:[#allocation5 + $0x198] sm:$0xff]
    %v115 = vld [vmem:[#allocation5 + $0x1a0] sm:$0xff]
    %v116 = vld [vmem:[#allocation5 + $0x1a8] sm:$0xff]
    %v117 = vld [vmem:[#allocation5 + $0x1b0] sm:$0xff]
    %v118 = vld [vmem:[#allocation5 + $0x1b8] sm:$0xff]
    %v119 = vld [vmem:[#allocation5 + $0x1c0] sm:$0xff]
    %v120 = vld [vmem:[#allocation5 + $0x1c8] sm:$0xff]
    %v121 = vld [vmem:[#allocation5 + $0x1d0] sm:$0xff]
    %v122 = vld [vmem:[#allocation5 + $0x1d8] sm:$0xff]
    %v123 = vld [vmem:[#allocation5 + $0x1e0] sm:$0xff]
    %v124 = vld [vmem:[#allocation5 + $0x1e8] sm:$0xff]
    %v125 = vld [vmem:[#allocation5 + $0x1f0] sm:$0xff]
    %v126 = vld [vmem:[#allocation5 + $0x1f8] sm:$0xff]
    %v127 = vld [vmem:[#allocation5 + $0x200] sm:$0xff]
    %v128 = vld [vmem:[#allocation5 + $0x208] sm:$0xff]
    %v129 = vld [vmem:[#allocation5 + $0x210] sm:$0xff]
    %v130 = vld [vmem:[#allocation5 + $0x218] sm:$0xff]
    %v131 = vld [vmem:[#allocation5 + $0x220] sm:$0xff]
    %v132 = vld [vmem:[#allocation5 + $0x228] sm:$0xff]
    %v133 = vld [vmem:[#allocation5 + $0x230] sm:$0xff]
    %v134 = vld [vmem:[#allocation5 + $0x238] sm:$0xff]
    %v135 = vld [vmem:[#allocation5 + $0x240] sm:$0xff]
    %v136 = vld [vmem:[#allocation5 + $0x248] sm:$0xff]
    %v137 = vld [vmem:[#allocation5 + $0x250] sm:$0xff]
    %v138 = vld [vmem:[#allocation5 + $0x258] sm:$0xff]
    %v139 = vld [vmem:[#allocation5 + $0x260] sm:$0xff]
    %v140 = vld [vmem:[#allocation5 + $0x268] sm:$0xff]
    %v141 = vld [vmem:[#allocation5 + $0x270] sm:$0xff]
    %v142 = vld [vmem:[#allocation5 + $0x278] sm:$0xff]
    %v143 = vld [vmem:[#allocation5 + $0x280] sm:$0xff]
    %v144 = vld [vmem:[#allocation5 + $0x288] sm:$0xff]
    %v145 = vld [vmem:[#allocation5 + $0x290] sm:$0xff]
    %v146 = vld [vmem:[#allocation5 + $0x298] sm:$0xff]
    %v147 = vld [vmem:[#allocation5 + $0x2a0] sm:$0xff]
    %v148 = vld [vmem:[#allocation5 + $0x2a8] sm:$0xff]
    %v149 = vld [vmem:[#allocation5 + $0x2b0] sm:$0xff]
    %v150 = vld [vmem:[#allocation5 + $0x2b8] sm:$0xff]
    %v151 = vld [vmem:[#allocation5 + $0x2c0] sm:$0xff]
    %v152 = vld [vmem:[#allocation5 + $0x2c8] sm:$0xff]
    %v153 = vld [vmem:[#allocation5 + $0x2d0] sm:$0xff]
    %v154 = vld [vmem:[#allocation5 + $0x2d8] sm:$0xff]
    %v155 = vld [vmem:[#allocation5 + $0x2e0] sm:$0xff]
    %v156 = vld [vmem:[#allocation5 + $0x2e8] sm:$0xff]
    %v157 = vld [vmem:[#allocation5 + $0x2f0] sm:$0xff]
    %v158 = vld [vmem:[#allocation5 + $0x2f8] sm:$0xff]
    %v159 = vld [vmem:[#allocation7] sm:$0x7]
    %v161 = vperm.slane %v62, 0
    %v162 = vperm.slane %v62, 1
    %v166 = vperm.slane %v159, 0
    %v167 = vperm.slane %v159, 1
    %v168 = vperm.slane %v159, 2
    %172 = vmatpush.msra.mxu0 %v108
    %173 = vmatpush.msra.mxu0 %v105
    %174 = vmatpush.msra.mxu0 %v102
    %175 = vmatpush.msra.mxu0 %v99
    %176 = vmatpush.msra.mxu0 %v96
    %177 = vmatpush.msra.mxu0 %v93
    %178 = vmatpush.msra.mxu0 %v90
    %179 = vmatpush.msra.mxu0 %v87
    %180 = vmatpush.msra.mxu0 %v84
    %181 = vmatpush.msra.mxu0 %v81
    %182 = vmatpush.msra.mxu0 %v78
    %183 = vmatpush.msra.mxu0 %v75
    %184 = vmatpush.msra.mxu0 %v72
    %185 = vmatpush.msra.mxu0 %v69
    %186 = vmatpush.msra.mxu0 %v66
    %187 = vmatpush.msra.mxu0 %v63
    %188 = vmatmul.f32.gmra.mxu0 %v161
    %v189 = vpop.f32.mrf.mxu0
    %v190 = vadd.f32 %v166, %v189
    %191 = vdwg.mxu0
    %192 = vmatpush.msra.mxu0 %v156
    %193 = vmatpush.msra.mxu0 %v153
    %194 = vmatpush.msra.mxu0 %v150
    %195 = vmatpush.msra.mxu0 %v147
    %196 = vmatpush.msra.mxu0 %v144
    %197 = vmatpush.msra.mxu0 %v141
    %198 = vmatpush.msra.mxu0 %v138
    %199 = vmatpush.msra.mxu0 %v135
    %200 = vmatpush.msra.mxu0 %v132
    %201 = vmatpush.msra.mxu0 %v129
    %202 = vmatpush.msra.mxu0 %v126
    %203 = vmatpush.msra.mxu0 %v123
    %204 = vmatpush.msra.mxu0 %v120
    %205 = vmatpush.msra.mxu0 %v117
    %206 = vmatpush.msra.mxu0 %v114
    %207 = vmatpush.msra.mxu0 %v111
    %208 = vmatmul.f32.gmra.mxu0 %v162
    %v209 = vpop.f32.mrf.mxu0
    %v210 = vadd.f32 %v190, %v209
    %211 = vdwg.mxu0
    %212 = vmatpush.msra.mxu0 %v109
    %213 = vmatpush.msra.mxu0 %v106
    %214 = vmatpush.msra.mxu0 %v103
    %215 = vmatpush.msra.mxu0 %v100
    %216 = vmatpush.msra.mxu0 %v97
    %217 = vmatpush.msra.mxu0 %v94
    %218 = vmatpush.msra.mxu0 %v91
    %219 = vmatpush.msra.mxu0 %v88
    %220 = vmatpush.msra.mxu0 %v85
    %221 = vmatpush.msra.mxu0 %v82
    %222 = vmatpush.msra.mxu0 %v79
    %223 = vmatpush.msra.mxu0 %v76
    %224 = vmatpush.msra.mxu0 %v73
    %225 = vmatpush.msra.mxu0 %v70
    %226 = vmatpush.msra.mxu0 %v67
    %227 = vmatpush.msra.mxu0 %v64
    %228 = vmatmul.f32.gmra.mxu0 %v161
    %v229 = vpop.f32.mrf.mxu0
    %v230 = vadd.f32 %v167, %v229
    %231 = vdwg.mxu0
    %232 = vmatpush.msra.mxu0 %v157
    %233 = vmatpush.msra.mxu0 %v154
    %234 = vmatpush.msra.mxu0 %v151
    %235 = vmatpush.msra.mxu0 %v148
    %236 = vmatpush.msra.mxu0 %v145
    %237 = vmatpush.msra.mxu0 %v142
    %238 = vmatpush.msra.mxu0 %v139
    %239 = vmatpush.msra.mxu0 %v136
    %240 = vmatpush.msra.mxu0 %v133
    %241 = vmatpush.msra.mxu0 %v130
    %242 = vmatpush.msra.mxu0 %v127
    %243 = vmatpush.msra.mxu0 %v124
    %244 = vmatpush.msra.mxu0 %v121
    %245 = vmatpush.msra.mxu0 %v118
    %246 = vmatpush.msra.mxu0 %v115
    %247 = vmatpush.msra.mxu0 %v112
    %248 = vmatmul.f32.gmra.mxu0 %v162
    %v249 = vpop.f32.mrf.mxu0
    %v250 = vadd.f32 %v230, %v249
    %251 = vdwg.mxu0
    %252 = vmatpush.msra.mxu0 %v110
    %253 = vmatpush.msra.mxu0 %v107
    %254 = vmatpush.msra.mxu0 %v104
    %255 = vmatpush.msra.mxu0 %v101
    %256 = vmatpush.msra.mxu0 %v98
    %257 = vmatpush.msra.mxu0 %v95
    %258 = vmatpush.msra.mxu0 %v92
    %259 = vmatpush.msra.mxu0 %v89
    %260 = vmatpush.msra.mxu0 %v86
    %261 = vmatpush.msra.mxu0 %v83
    %262 = vmatpush.msra.mxu0 %v80
    %263 = vmatpush.msra.mxu0 %v77
    %264 = vmatpush.msra.mxu0 %v74
    %265 = vmatpush.msra.mxu0 %v71
    %266 = vmatpush.msra.mxu0 %v68
    %267 = vmatpush.msra.mxu0 %v65
    %268 = vmatmul.f32.gmra.mxu0 %v161
    %v269 = vpop.f32.mrf.mxu0
    %v270 = vadd.f32 %v168, %v269
    %271 = vdwg.mxu0
    %272 = vmatpush.msra.mxu0 %v158
    %273 = vmatpush.msra.mxu0 %v155
    %274 = vmatpush.msra.mxu0 %v152
    %275 = vmatpush.msra.mxu0 %v149
    %276 = vmatpush.msra.mxu0 %v146
    %277 = vmatpush.msra.mxu0 %v143
    %278 = vmatpush.msra.mxu0 %v140
    %279 = vmatpush.msra.mxu0 %v137
    %280 = vmatpush.msra.mxu0 %v134
    %281 = vmatpush.msra.mxu0 %v131
    %282 = vmatpush.msra.mxu0 %v128
    %283 = vmatpush.msra.mxu0 %v125
    %284 = vmatpush.msra.mxu0 %v122
    %285 = vmatpush.msra.mxu0 %v119
    %286 = vmatpush.msra.mxu0 %v116
    %287 = vmatpush.msra.mxu0 %v113
    %288 = vmatmul.f32.gmra.mxu0 %v162
    %v289 = vpop.f32.mrf.mxu0
    %v290 = vadd.f32 %v270, %v289
    %291 = vdwg.mxu0
    %v292 = vmax.f32 %v210, 0.0
    %v293 = vand.u32 2147483647, %v210
    %v294 = vsub.f32 0.0, %v293
    %v295 = vmul.f32 %v294, 1.442695
    %v296 = vpow.pop %v295
    %v297 = vadd.f32 %v296, 1.0
    %v298 = vlog2.pop %v297
    %v299 = vmul.f32 %v298, 0.6931472
    %v300 = vmul.f32 -0.5, %v296
    %v301 = vadd.f32 %v300, 1.0
    %v302 = vmul.f32 %v301, %v296
    %v303 = vand.u32 2147483647, %v296
    %vm304 = vcmp.lt.f32.partialorder %v303, 0.0004427343
    %v305 = vsel %vm304, %v302, %v299
    %v306 = vadd.f32 %v292, %v305
    %307 = vst [vmem:[#allocation8] sm:$0x1] %v306
    %v308 = vxor.u32 %v250, 2147483648
    %v309 = vmul.f32 %v308, 1.442695
    %v310 = vpow.pop %v309
    %v311 = vadd.f32 %v310, 1.0
    %v312 = vrcp.pop %v311
    %v313 = vmul.f32 %v311, %v312
    %v314 = vsub.f32 1.0, %v313
    %v315 = vmul.f32 %v312, %v314
    %v316 = vadd.f32 %v312, %v315
    %vm317 = vweird.f32 %v311
    %vm318 = vweird.f32 %v312
    %vm319 = vmor %vm317, %vm318
    %v320 = vsel %vm319, %v312, %v316
    %v321 = vand.u32 2147483647, %v311
    %vm322 = vcmp.eq.f32.partialorder %v321, 8.507059e+37
    %v323 = vand.u32 %v311, 2147483648
    %v324 = vor.u32 1.1754944e-38, %v323
    %v325 = vsel %vm322, %v324, %v320
    %v326 = vmul.f32 1.0, %v325
    %327 = vst [vmem:[#allocation9] sm:$0x1] %v326
    %v328 = vxor.u32 %v290, 2147483648
    %v329 = vmul.f32 %v328, 1.442695
    %v330 = vpow.pop %v329
    %v331 = vadd.f32 %v330, 1.0
    %v332 = vrcp.pop %v331
    %v333 = vmul.f32 %v331, %v332
    %v334 = vsub.f32 1.0, %v333
    %v335 = vmul.f32 %v332, %v334
    %v336 = vadd.f32 %v332, %v335
    %vm337 = vweird.f32 %v331
    %vm338 = vweird.f32 %v332
    %vm339 = vmor %vm337, %vm338
    %v340 = vsel %vm339, %v332, %v336
    %v341 = vand.u32 2147483647, %v331
    %vm342 = vcmp.eq.f32.partialorder %v341, 8.507059e+37
    %v343 = vand.u32 %v331, 2147483648
    %v344 = vor.u32 1.1754944e-38, %v343
    %v345 = vsel %vm342, %v344, %v340
    %v346 = vmul.f32 1.0, %v345
    %347 = vst [vmem:[#allocation11] sm:$0x1] %v346
    // Predicated region
    $region26: #{tpu_custom_call.1} parent=1 // pred_check
      _
    $region27: #{tpu_custom_call.1} parent=1 // pred_check_branch
      %349 = sbr.rel (0) target = $region29
    $region28: #{tpu_custom_call.1} parent=1 // pred_region
      %351 = vsyncadd [#allocation4], 0
      %s353 = sshll.u32 [#allocation8], 4
      %s354 = int_to_ptr.vmem [resolvable:$true] %s353
      %s355 = sshll.u32 %s3, 4
      %s356 = int_to_ptr.hbm [resolvable:$true] %s355
      %358 = dma.vmem_to_hbm [thread:$0]  %s354, 16, %s356, [#allocation4]
    $region29: #{tpu_custom_call.1} parent=1 // pred_fallthru
      _
    // Predicated region
    $region30: #{tpu_custom_call.1} parent=1 // pred_check
      _
    $region31: #{tpu_custom_call.1} parent=1 // pred_check_branch
      %360 = sbr.rel (0) target = $region33
    $region32: #{tpu_custom_call.1} parent=1 // pred_region
      %362 = vsyncadd [#allocation10], 0
      %s364 = sshll.u32 [#allocation9], 4
      %s365 = int_to_ptr.vmem [resolvable:$true] %s364
      %s366 = sshll.u32 %s4, 4
      %s367 = int_to_ptr.hbm [resolvable:$true] %s366
      %369 = dma.vmem_to_hbm [thread:$0]  %s365, 16, %s367, [#allocation10]
    $region33: #{tpu_custom_call.1} parent=1 // pred_fallthru
      _
    // Predicated region
    $region34: #{tpu_custom_call.1} parent=1 // pred_check
      _
    $region35: #{tpu_custom_call.1} parent=1 // pred_check_branch
      %371 = sbr.rel (0) target = $region37
    $region36: #{tpu_custom_call.1} parent=1 // pred_region
      %373 = vsyncadd [#allocation10], 0
      %s375 = sshll.u32 [#allocation11], 4
      %s376 = int_to_ptr.vmem [resolvable:$true] %s375
      %s377 = sshll.u32 %s5, 4
      %s378 = int_to_ptr.hbm [resolvable:$true] %s377
      %380 = dma.vmem_to_hbm [thread:$0]  %s376, 16, %s378, [#allocation10]
    $region37: #{tpu_custom_call.1} parent=1 // pred_fallthru
      _
    // Predicated region
    $region38: #{tpu_custom_call.1} parent=1 // pred_check
      _
    $region39: #{tpu_custom_call.1} parent=1 // pred_check_branch
      %382 = sbr.rel (0) target = $region41
    $region40: #{tpu_custom_call.1} parent=1 // pred_region
      %384 = dma.done [#allocation4], 16
    $region41: #{tpu_custom_call.1} parent=1 // pred_fallthru
      _
    // Predicated region
    $region42: #{tpu_custom_call.1} parent=1 // pred_check
      _
    $region43: #{tpu_custom_call.1} parent=1 // pred_check_branch
      %386 = sbr.rel (0) target = $region45
    $region44: #{tpu_custom_call.1} parent=1 // pred_region
      %388 = dma.done [#allocation10], 16
    $region45: #{tpu_custom_call.1} parent=1 // pred_fallthru
      _
    // Predicated region
    $region46: #{tpu_custom_call.1} parent=1 // pred_check
      _
    $region47: #{tpu_custom_call.1} parent=1 // pred_check_branch
      %390 = sbr.rel (0) target = $region49
    $region48: #{tpu_custom_call.1} parent=1 // pred_region
      %392 = dma.done [#allocation10], 16
    $region49: #{tpu_custom_call.1} parent=1 // pred_fallthru
      _
    %393 = vsyncpa [#allocation3], 1
    %394 = vsyncpa [#allocation6], 1
    %395 = vsyncpa [#allocation4], 1
    %396 = vsyncpa [#allocation10], 1

</llo_original>
